<compile_context>
chip_gen: v6e
topology: v6e:2x2x1
jax: 0.10.0
libtpu: 0.0.40
codegen_flags: <defaults>
</compile_context>

<pallas_src>
import math
import functools

import numpy as np
import jax
import jax.numpy as jnp
from jax import lax
from jax.experimental import pallas as pl
from jax.experimental.pallas import tpu as pltpu

# ---------------- Activation1d hyper-parameters (module defaults) ----------------
UP_RATIO = 2
DOWN_RATIO = 2
UP_K = 12            # up_kernel_size
DOWN_K = 12          # down_kernel_size
assert UP_RATIO == 2 and DOWN_RATIO == 2, "polyphase offsets below assume ratio=2"

UP_STRIDE = UP_RATIO
UP_PAD = UP_K // UP_RATIO - 1                                   # 5
UP_CROP_L = UP_PAD * UP_STRIDE + (UP_K - UP_STRIDE) // 2        # 15
UP_CROP_R = UP_PAD * UP_STRIDE + (UP_K - UP_STRIDE + 1) // 2    # 15
DOWN_PAD_L = DOWN_K // 2 - 1                                    # 5
DOWN_PAD_R = DOWN_K // 2                                        # 6

X_HALO = 16          # halo columns copied from the next tile (>= 12 are needed)
PHASE_EXT = 6        # extra phase columns per tile: m in [n0-3, n0+TT+2]


def kaiser_sinc_filter1d(cutoff, half_width, kernel_size):
    """NumPy port of BigVGAN's kaiser_sinc_filter1d (deterministic, no torch)."""
    even = (kernel_size % 2 == 0)
    half_size = kernel_size // 2
    delta_f = 4 * half_width
    A = 2.285 * (half_size - 1) * math.pi * delta_f + 7.95
    if A > 50.0:
        beta = 0.1102 * (A - 8.7)
    elif A >= 21.0:
        beta = 0.5842 * (A - 21.0) ** 0.4 + 0.07886 * (A - 21.0)
    else:
        beta = 0.0
    window = np.kaiser(kernel_size, beta)
    if even:
        time = np.arange(-half_size, half_size) + 0.5
    else:
        time = np.arange(kernel_size) - half_size
    if cutoff == 0:
        return np.zeros(kernel_size, dtype=np.float32)
    filt = 2 * cutoff * window * np.sinc(2 * cutoff * time)
    filt = filt / filt.sum()
    return filt.astype(np.float32)


UP_FILTER = [float(v) for v in kaiser_sinc_filter1d(0.5 / UP_RATIO, 0.6 / UP_RATIO, UP_K)]
DOWN_FILTER = [float(v) for v in kaiser_sinc_filter1d(0.5 / DOWN_RATIO, 0.6 / DOWN_RATIO, DOWN_K)]
UP_F2 = [float(UP_RATIO) * f for f in UP_FILTER]     # ratio gain folded into the taps

# Polyphase relations (ratio=2, kernel=12, crop 15):
#   ye[m] = 2 * sum_i f_up[2i+1] * x[clip(m+2-i)]        (even output phase)
#   yo[m] = 2 * sum_i f_up[2i]   * x[clip(m+3-i)]        (odd  output phase)
#   z[n]  = sum_i f_dn[2i] * YO[n+i-3] + f_dn[2i+1] * YE[n+i-2]
# with YE/YO replicate-clamped at the phase level (idx<0 -> ye[0]; idx>=T -> yo[T-1]).
#
# Shared-window up-conv: in local scratch coordinates,
#   ye[p] = sum_{o=0..5} CE[o] * xw[p+o],  yo[p] = sum_{o=1..6} CO[o-1] * xw[p+o]
CE = [UP_F2[11 - 2 * o] for o in range(6)]           # ye coefficient at offset o
CO = [UP_F2[12 - 2 * o] for o in range(1, 7)]        # yo coefficient at offset o
# Symmetric down-conv: f_dn[2i+1] == f_dn[10-2i]  (Kaiser-sinc filter is symmetric), so
#   z[n] = sum_i E_i * (YO[n+i-3] + YE[n+3-i]),  E_i = f_dn[2i]  (symmetrized below).
DN_SYM = [0.5 * (DOWN_FILTER[2 * i] + DOWN_FILTER[11 - 2 * i]) for i in range(6)]


# ------------------------------- fused Pallas kernel --------------------------------
def _act1d_fused_kernel(xc_ref, xh_ref, a_ref, ia_ref, olast_ref, z_ref,
                        xw_ref, ye_ref, yo_ref, *, t_true):
    RT, TT = z_ref.shape
    PW = TT + PHASE_EXT                      # extended phase window: m in [n0-3, n0+TT+2]

    # ---- assemble the contiguous (RT, TT+16) x-window in VMEM scratch (core + halo) ----
    xw_ref[:, :TT] = xc_ref[...].astype(jnp.float32)
    xw_ref[:, TT:TT + X_HALO] = xh_ref[:, :X_HALO].astype(jnp.float32)

    # ---- UpSample1d: polyphase stride-2 transposed conv, 7 shared shifted windows ----
    ye = None
    yo = None
    for o in range(7):
        w = xw_ref[:, o:o + PW]              # each offset loaded once, used by both phases
        if o < 6:
            ye = CE[o] * w if ye is None else ye + CE[o] * w
        if o > 0:
            yo = CO[o - 1] * w if yo is None else yo + CO[o - 1] * w

    # ---- Snake: y + (1/alpha) * sin(alpha*y)^2   (1/alpha precomputed per row) ----
    a = a_ref[...]                           # (RT, 1), broadcasts over lanes
    ia = ia_ref[...]
    se = jnp.sin(a * ye)
    so = jnp.sin(a * yo)
    ye_ref[...] = ye + ia * (se * se)
    yo_ref[...] = yo + ia * (so * so)

    # ---- replicate padding of the *activated upsampled* signal at the global edges ----
    t = pl.program_id(1)
    n0 = t * TT                              # first output column of this tile

    @pl.when(t == 0)
    def _left_patch():
        # phase positions m < 0 (local p in {0,1,2}) take the value at m == 0 (even phase)
        p_idx = lax.broadcasted_iota(jnp.int32, (RT, 128), 1)
        e0 = ye_ref[:, 3:4]
        msk = p_idx < 3
        ye_ref[:, :128] = jnp.where(msk, e0, ye_ref[:, :128])
        yo_ref[:, :128] = jnp.where(msk, e0, yo_ref[:, :128])

    @pl.when(n0 + TT + 2 >= t_true)
    def _right_patch():
        # phase positions m >= T take the value at m == T-1 (odd phase, precomputed)
        midx = lax.broadcasted_iota(jnp.int32, (RT, PW), 1) + (n0 - 3)
        ol = olast_ref[...]                  # (RT, 1) activated yo[T-1]
        keep = midx < t_true
        ye_ref[...] = jnp.where(keep, ye_ref[...], ol)
        yo_ref[...] = jnp.where(keep, yo_ref[...], ol)

    # ---- DownSample1d: stride-2 low-pass conv, symmetric form (6 multiplies) ----
    acc = None
    for i in range(6):
        term = yo_ref[:, i:i + TT] + ye_ref[:, 6 - i:6 - i + TT]
        acc = DN_SYM[i] * term if acc is None else acc + DN_SYM[i] * term
    z_ref[...] = acc.astype(z_ref.dtype)


# --------------------------------- wrapper --------------------------------------
def _vmem_budget():
    """Per-generation tile caps + scoped VMEM limit (conservative fallback)."""
    try:
        cap = int(pltpu.get_tpu_info().vmem_capacity_bytes)
    except Exception:
        cap = 64 * 1024 * 1024
    if cap >= 100 * 1024 * 1024:             # v5e / v6e: 128 MiB physical VMEM
        return 512, 2048, 64 * 1024 * 1024
    return 256, 2048, 40 * 1024 * 1024       # v7x: 64 MiB VMEM per TensorCore


def activation1d_forward(x, alpha, *, row_tile=None, time_tile=None, io_dtype=None):
    """x: (B, C, T) float32; alpha: (C,) Snake alpha.  Returns (B, C, T).

    io_dtype=jnp.bfloat16 enables bf16 HBM I/O (f32 compute) for HBM-tight v5e
    deployments; default f32 keeps exactness.
    """
    B, C, T = x.shape
    R = B * C
    cdiv = lambda a, b: -(-a // b)
    io_dtype = jnp.float32 if io_dtype is None else io_dtype

    RT_MAX, TT_MAX, vmem_limit = _vmem_budget()

    # --- balanced tile selection: time tile multiple of 128, row tile multiple of 8 ---
    if time_tile is None:
        kt = cdiv(T, TT_MAX)
        time_tile = cdiv(cdiv(T, kt), 128) * 128
    TT = max(128, int(time_tile))
    assert TT % 128 == 0
    if row_tile is None:
        kr = cdiv(R, RT_MAX)
        row_tile = cdiv(cdiv(R, kr), 8) * 8
    RT = max(8, int(row_tile))
    assert RT % 8 == 0

    n_t = cdiv(T, TT)
    T_pad = n_t * TT
    n_r = cdiv(R, RT)
    R_pad = n_r * RT

    # --- layout glue (cheap): flatten rows, pad rows, replicate-pad time ---
    xr = x.reshape(R, T).astype(jnp.float32)
    if R_pad > R:
        xr = jnp.pad(xr, ((0, R_pad - R), (0, 0)))
    # Xp[:, c] == x[clip(c - 6, 0, T-1)]; width T_pad + 128 so the halo BlockSpec of the
    # last time tile is in range.
    Xp = jnp.pad(xr, ((0, 0), (6, T_pad + 128 - T - 6)), mode="edge").astype(io_dtype)

    alpha = alpha.astype(jnp.float32)
    a_rows = jnp.broadcast_to(alpha[None, :], (B, C)).reshape(R, 1)
    ia_rows = jnp.broadcast_to((1.0 / (alpha + 1e-9))[None, :], (B, C)).reshape(R, 1)
    if R_pad > R:
        a_rows = jnp.pad(a_rows, ((0, R_pad - R), (0, 0)), constant_values=1.0)
        ia_rows = jnp.pad(ia_rows, ((0, R_pad - R), (0, 0)), constant_values=1.0)

    # --- activated odd-phase value at m == T-1 (right replicate patch), per row ---
    idxs = [min(max(T - 1 + 3 - i, 0), T - 1) for i in range(6)]
    yo_last = sum(UP_F2[2 * i] * xr[:, idxs[i]] for i in range(6))[:, None]   # (R_pad, 1)
    o_last = yo_last + ia_rows * jnp.sin(a_rows * yo_last) ** 2

    kernel = functools.partial(_act1d_fused_kernel, t_true=T)

    hb = TT // 128   # halo block index stride (128-wide blocks)
    cost = pl.CostEstimate(
        flops=50 * R_pad * T_pad,
        transcendentals=2 * R_pad * T_pad,
        bytes_accessed=4 * R_pad * (2 * T_pad + 128 * n_t) + 32 * R_pad,
    )

    z = pl.pallas_call(
        kernel,
        out_shape=jax.ShapeDtypeStruct((R_pad, T_pad), io_dtype),
        grid=(n_r, n_t),
        in_specs=[
            pl.BlockSpec((RT, TT), lambda r, t: (r, t)),                        # core x
            pl.BlockSpec((RT, 128), lambda r, t: (r, (t + 1) * hb)),            # x halo
            pl.BlockSpec((RT, 1), lambda r, t: (r, 0)),                         # alpha
            pl.BlockSpec((RT, 1), lambda r, t: (r, 0)),                         # 1/alpha
            pl.BlockSpec((RT, 1), lambda r, t: (r, 0)),                         # yo[T-1] act.
        ],
        out_specs=pl.BlockSpec((RT, TT), lambda r, t: (r, t)),
        scratch_shapes=[
            pltpu.VMEM((RT, TT + X_HALO), jnp.float32),        # assembled x window
            pltpu.VMEM((RT, TT + PHASE_EXT), jnp.float32),     # even phase (activated)
            pltpu.VMEM((RT, TT + PHASE_EXT), jnp.float32),     # odd  phase (activated)
        ],
        compiler_params=pltpu.CompilerParams(
            dimension_semantics=("parallel", "parallel"),
            vmem_limit_bytes=vmem_limit,
        ),
        cost_estimate=cost,
    )(Xp, Xp, a_rows, ia_rows, o_last)

    return z[:R, :T].reshape(B, C, T)


# --------------------------- independent numpy reference -------------------------
def _reference_numpy(x, alpha):
    B, C, T = x.shape
    f_up = np.array(UP_FILTER, dtype=np.float64)
    f_dn = np.array(DOWN_FILTER, dtype=np.float64)
    xp = np.pad(x.astype(np.float64), ((0, 0), (0, 0), (UP_PAD, UP_PAD)), mode="edge")
    Lp = T + 2 * UP_PAD
    yf = np.zeros((B, C, 2 * Lp + UP_K - 2), dtype=np.float64)
    for j in range(Lp):                      # conv_transpose1d, stride 2, depthwise
        for k in range(UP_K):
            yf[..., 2 * j + k] += xp[..., j] * f_up[k]
    y = UP_RATIO * yf[..., UP_CROP_L: UP_CROP_L + 2 * T]
    a = alpha.reshape(1, C, 1).astype(np.float64)
    y = y + (1.0 / (a + 1e-9)) * np.sin(a * y) ** 2          # Snake activation
    yp = np.pad(y, ((0, 0), (0, 0), (DOWN_PAD_L, DOWN_PAD_R)), mode="edge")
    z = np.zeros((B, C, T), dtype=np.float64)
    for n in range(T):                       # conv1d, stride 2, depthwise
        for k in range(DOWN_K):
            z[..., n] += f_dn[k] * yp[..., DOWN_RATIO * n + k]
    return z.astype(np.float32)


if __name__ == "__main__":
    key = jax.random.PRNGKey(0)
    k1, k2 = jax.random.split(key)

    # --- Test 1: module-scale small shapes (single tile path, default tiles) ---
    B, C, T = 2, 4, 16
    x1 = jax.random.normal(k1, (B, C, T), dtype=jnp.float32)
    alpha1 = 1.0 + 0.1 * jnp.arange(C, dtype=jnp.float32)   # deterministic Snake alpha
    out1 = jax.block_until_ready(activation1d_forward(x1, alpha1))
    assert out1.shape == (B, C, T)
    ref1 = _reference_numpy(np.asarray(x1), np.asarray(alpha1))
    np.testing.assert_allclose(np.asarray(out1), ref1, rtol=1e-4, atol=1e-4)

    # --- Test 2: multi-tile path (row padding, 3 time tiles, unaligned T) ---
    B2, C2, T2 = 2, 3, 300
    x2 = jax.random.normal(k2, (B2, C2, T2), dtype=jnp.float32)
    alpha2 = 0.5 + 0.25 * jnp.arange(C2, dtype=jnp.float32)
    out2 = jax.block_until_ready(
        activation1d_forward(x2, alpha2, row_tile=8, time_tile=128))
    ref2 = _reference_numpy(np.asarray(x2), np.asarray(alpha2))
    np.testing.assert_allclose(np.asarray(out2), ref2, rtol=1e-4, atol=1e-4)

    print("KERNEL_OK")
</pallas_src>

<mosaic_0001>
module attributes {stable_mosaic.version = 11 : i64} {
  func.func @_act1d_fused_kernel(%arg0: i32, %arg1: i32, %arg2: memref<8x128xf32, #tpu.memory_space<vmem>>, %arg3: memref<8x128xf32, #tpu.memory_space<vmem>>, %arg4: memref<8x1xf32, #tpu.memory_space<vmem>>, %arg5: memref<8x1xf32, #tpu.memory_space<vmem>>, %arg6: memref<8x1xf32, #tpu.memory_space<vmem>>, %arg7: memref<8x128xf32, #tpu.memory_space<vmem>>, %arg8: memref<8x144xf32, #tpu.memory_space<vmem>>, %arg9: memref<8x134xf32, #tpu.memory_space<vmem>>, %arg10: memref<8x134xf32, #tpu.memory_space<vmem>>) attributes {dimension_semantics = [#tpu.dimension_semantics<parallel>, #tpu.dimension_semantics<parallel>], iteration_bounds = array<i64: 1, 1>, scalar_prefetch = 0 : i64, scratch_operands = 3 : i64, tpu.core_type = #tpu.core_type<tc>, window_params = [{transform_indices = @transform_0, window_bounds = array<i64: 8, 128>}, {transform_indices = @transform_1, window_bounds = array<i64: 8, 128>}, {transform_indices = @transform_2, window_bounds = array<i64: 8, 1>}, {transform_indices = @transform_3, window_bounds = array<i64: 8, 1>}, {transform_indices = @transform_4, window_bounds = array<i64: 8, 1>}, {transform_indices = @transform_5, window_bounds = array<i64: 8, 128>}]} {
    %c0 = arith.constant 0 : index
    %c0_0 = arith.constant 0 : index
    %0 = vector.load %arg2[%c0, %c0_0] : memref<8x128xf32, #tpu.memory_space<vmem>>, vector<8x128xf32>
    %c0_1 = arith.constant 0 : index
    %c0_2 = arith.constant 0 : index
    %1 = vector.load %arg8[%c0_1, %c0_2] : memref<8x144xf32, #tpu.memory_space<vmem>>, vector<8x128xf32>
    tpu.vector_store %arg8[%c0_1, %c0_2], %0 {strides = array<i32>} : memref<8x144xf32, #tpu.memory_space<vmem>>, vector<8x128xf32>,
    %c0_3 = arith.constant 0 : index
    %c0_4 = arith.constant 0 : index
    %2 = vector.load %arg3[%c0_3, %c0_4] : memref<8x128xf32, #tpu.memory_space<vmem>>, vector<8x16xf32>
    %c0_5 = arith.constant 0 : index
    %c128 = arith.constant 128 : index
    %3 = vector.load %arg8[%c0_5, %c128] : memref<8x144xf32, #tpu.memory_space<vmem>>, vector<8x16xf32>
    tpu.vector_store %arg8[%c0_5, %c128], %2 {strides = array<i32>} : memref<8x144xf32, #tpu.memory_space<vmem>>, vector<8x16xf32>,
    %c0_6 = arith.constant 0 : index
    %c0_7 = arith.constant 0 : index
    %4 = vector.load %arg8[%c0_6, %c0_7] : memref<8x144xf32, #tpu.memory_space<vmem>>, vector<8x134xf32>
    %cst = arith.constant 0.00405793311 : f32
    %5 = vector.broadcast %cst : f32 to vector<8x134xf32>
    %6 = arith.mulf %5, %4 : vector<8x134xf32>
    %c0_8 = arith.constant 0 : index
    %c1 = arith.constant 1 : index
    %7 = vector.load %arg8[%c0_8, %c1] : memref<8x144xf32, #tpu.memory_space<vmem>>, vector<8x134xf32>
    %cst_9 = arith.constant -0.0510869287 : f32
    %8 = vector.broadcast %cst_9 : f32 to vector<8x134xf32>
    %9 = arith.mulf %8, %7 : vector<8x134xf32>
    %10 = arith.addf %6, %9 : vector<8x134xf32>
    %cst_10 = arith.constant 0.0187789276 : f32
    %11 = vector.broadcast %cst_10 : f32 to vector<8x134xf32>
    %12 = arith.mulf %11, %7 : vector<8x134xf32>
    %c0_11 = arith.constant 0 : index
    %c2 = arith.constant 2 : index
    %13 = vector.load %arg8[%c0_11, %c2] : memref<8x144xf32, #tpu.memory_space<vmem>>, vector<8x134xf32>
    %cst_12 = arith.constant 0.257145226 : f32
    %14 = vector.broadcast %cst_12 : f32 to vector<8x134xf32>
    %15 = arith.mulf %14, %13 : vector<8x134xf32>
    %16 = arith.addf %10, %15 : vector<8x134xf32>
    %cst_13 = arith.constant -0.115314752 : f32
    %17 = vector.broadcast %cst_13 : f32 to vector<8x134xf32>
    %18 = arith.mulf %17, %13 : vector<8x134xf32>
    %19 = arith.addf %12, %18 : vector<8x134xf32>
    %c0_14 = arith.constant 0 : index
    %c3 = arith.constant 3 : index
    %20 = vector.load %arg8[%c0_14, %c3] : memref<8x144xf32, #tpu.memory_space<vmem>>, vector<8x134xf32>
    %cst_15 = arith.constant 0.886419594 : f32
    %21 = vector.broadcast %cst_15 : f32 to vector<8x134xf32>
    %22 = arith.mulf %21, %20 : vector<8x134xf32>
    %23 = arith.addf %16, %22 : vector<8x134xf32>
    %cst_16 = arith.constant 0.886419594 : f32
    %24 = vector.broadcast %cst_16 : f32 to vector<8x134xf32>
    %25 = arith.mulf %24, %20 : vector<8x134xf32>
    %26 = arith.addf %19, %25 : vector<8x134xf32>
    %c0_17 = arith.constant 0 : index
    %c4 = arith.constant 4 : index
    %27 = vector.load %arg8[%c0_17, %c4] : memref<8x144xf32, #tpu.memory_space<vmem>>, vector<8x134xf32>
    %cst_18 = arith.constant -0.115314752 : f32
    %28 = vector.broadcast %cst_18 : f32 to vector<8x134xf32>
    %29 = arith.mulf %28, %27 : vector<8x134xf32>
    %30 = arith.addf %23, %29 : vector<8x134xf32>
    %cst_19 = arith.constant 0.257145226 : f32
    %31 = vector.broadcast %cst_19 : f32 to vector<8x134xf32>
    %32 = arith.mulf %31, %27 : vector<8x134xf32>
    %33 = arith.addf %26, %32 : vector<8x134xf32>
    %c0_20 = arith.constant 0 : index
    %c5 = arith.constant 5 : index
    %34 = vector.load %arg8[%c0_20, %c5] : memref<8x144xf32, #tpu.memory_space<vmem>>, vector<8x134xf32>
    %cst_21 = arith.constant 0.0187789276 : f32
    %35 = vector.broadcast %cst_21 : f32 to vector<8x134xf32>
    %36 = arith.mulf %35, %34 : vector<8x134xf32>
    %37 = arith.addf %30, %36 : vector<8x134xf32>
    %cst_22 = arith.constant -0.0510869287 : f32
    %38 = vector.broadcast %cst_22 : f32 to vector<8x134xf32>
    %39 = arith.mulf %38, %34 : vector<8x134xf32>
    %40 = arith.addf %33, %39 : vector<8x134xf32>
    %c0_23 = arith.constant 0 : index
    %c6 = arith.constant 6 : index
    %41 = vector.load %arg8[%c0_23, %c6] : memref<8x144xf32, #tpu.memory_space<vmem>>, vector<8x134xf32>
    %cst_24 = arith.constant 0.00405793311 : f32
    %42 = vector.broadcast %cst_24 : f32 to vector<8x134xf32>
    %43 = arith.mulf %42, %41 : vector<8x134xf32>
    %44 = arith.addf %40, %43 : vector<8x134xf32>
    %c0_25 = arith.constant 0 : index
    %c0_26 = arith.constant 0 : index
    %45 = vector.load %arg4[%c0_25, %c0_26] : memref<8x1xf32, #tpu.memory_space<vmem>>, vector<8x1xf32>
    %c0_27 = arith.constant 0 : index
    %c0_28 = arith.constant 0 : index
    %46 = vector.load %arg5[%c0_27, %c0_28] : memref<8x1xf32, #tpu.memory_space<vmem>>, vector<8x1xf32>
    %47 = vector.broadcast %45 : vector<8x1xf32> to vector<8x134xf32>
    %48 = arith.mulf %47, %37 : vector<8x134xf32>
    %49 = math.sin %48 : vector<8x134xf32>
    %50 = vector.broadcast %45 : vector<8x1xf32> to vector<8x134xf32>
    %51 = arith.mulf %50, %44 : vector<8x134xf32>
    %52 = math.sin %51 : vector<8x134xf32>
    %53 = arith.mulf %49, %49 : vector<8x134xf32>
    %54 = vector.broadcast %46 : vector<8x1xf32> to vector<8x134xf32>
    %55 = arith.mulf %54, %53 : vector<8x134xf32>
    %56 = arith.addf %37, %55 : vector<8x134xf32>
    %c0_29 = arith.constant 0 : index
    %c0_30 = arith.constant 0 : index
    %57 = vector.load %arg9[%c0_29, %c0_30] : memref<8x134xf32, #tpu.memory_space<vmem>>, vector<8x134xf32>
    tpu.vector_store %arg9[%c0_29, %c0_30], %56 {strides = array<i32>} : memref<8x134xf32, #tpu.memory_space<vmem>>, vector<8x134xf32>,
    %58 = arith.mulf %52, %52 : vector<8x134xf32>
    %59 = vector.broadcast %46 : vector<8x1xf32> to vector<8x134xf32>
    %60 = arith.mulf %59, %58 : vector<8x134xf32>
    %61 = arith.addf %44, %60 : vector<8x134xf32>
    %c0_31 = arith.constant 0 : index
    %c0_32 = arith.constant 0 : index
    %62 = vector.load %arg10[%c0_31, %c0_32] : memref<8x134xf32, #tpu.memory_space<vmem>>, vector<8x134xf32>
    tpu.vector_store %arg10[%c0_31, %c0_32], %61 {strides = array<i32>} : memref<8x134xf32, #tpu.memory_space<vmem>>, vector<8x134xf32>,
    %c128_i32 = arith.constant 128 : i32
    %63 = arith.muli %arg1, %c128_i32 : i32
    %c0_i32 = arith.constant 0 : i32
    %64 = arith.cmpi eq, %arg1, %c0_i32 : i32
    %65 = arith.extui %64 : i1 to i32
    %c0_i32_33 = arith.constant 0 : i32
    %66 = arith.cmpi ne, %65, %c0_i32_33 : i32
    scf.if %66 {
      %108 = tpu.iota {dimensions = array<i32: 1>} : vector<8x128xi32>
      %c0_68 = arith.constant 0 : index
      %c3_69 = arith.constant 3 : index
      %109 = vector.load %arg9[%c0_68, %c3_69] : memref<8x134xf32, #tpu.memory_space<vmem>>, vector<8x1xf32>
      %c3_i32 = arith.constant 3 : i32
      %110 = vector.broadcast %c3_i32 : i32 to vector<8x128xi32>
      %111 = arith.cmpi slt, %108, %110 : vector<8x128xi32>
      %c0_70 = arith.constant 0 : index
      %c0_71 = arith.constant 0 : index
      %112 = vector.load %arg9[%c0_70, %c0_71] : memref<8x134xf32, #tpu.memory_space<vmem>>, vector<8x128xf32>
      %113 = vector.shape_cast %109 : vector<8x1xf32> to vector<8x1xf32>
      %114 = vector.broadcast %113 : vector<8x1xf32> to vector<8x128xf32>
      %115 = arith.select %111, %114, %112 : vector<8x128xi1>, vector<8x128xf32>
      %c0_72 = arith.constant 0 : index
      %c0_73 = arith.constant 0 : index
      %116 = vector.load %arg9[%c0_72, %c0_73] : memref<8x134xf32, #tpu.memory_space<vmem>>, vector<8x128xf32>
      tpu.vector_store %arg9[%c0_72, %c0_73], %115 {strides = array<i32>} : memref<8x134xf32, #tpu.memory_space<vmem>>, vector<8x128xf32>,
      %c0_74 = arith.constant 0 : index
      %c0_75 = arith.constant 0 : index
      %117 = vector.load %arg10[%c0_74, %c0_75] : memref<8x134xf32, #tpu.memory_space<vmem>>, vector<8x128xf32>
      %118 = vector.shape_cast %109 : vector<8x1xf32> to vector<8x1xf32>
      %119 = vector.broadcast %118 : vector<8x1xf32> to vector<8x128xf32>
      %120 = arith.select %111, %119, %117 : vector<8x128xi1>, vector<8x128xf32>
      %c0_76 = arith.constant 0 : index
      %c0_77 = arith.constant 0 : index
      %121 = vector.load %arg10[%c0_76, %c0_77] : memref<8x134xf32, #tpu.memory_space<vmem>>, vector<8x128xf32>
      tpu.vector_store %arg10[%c0_76, %c0_77], %120 {strides = array<i32>} : memref<8x134xf32, #tpu.memory_space<vmem>>, vector<8x128xf32>,
    } else {
    }
    %c128_i32_34 = arith.constant 128 : i32
    %67 = arith.addi %63, %c128_i32_34 : i32
    %c2_i32 = arith.constant 2 : i32
    %68 = arith.addi %67, %c2_i32 : i32
    %c16_i32 = arith.constant 16 : i32
    %69 = arith.cmpi sge, %68, %c16_i32 : i32
    %70 = arith.extui %69 : i1 to i32
    %c0_i32_35 = arith.constant 0 : i32
    %71 = arith.cmpi ne, %70, %c0_i32_35 : i32
    scf.if %71 {
      %108 = tpu.iota {dimensions = array<i32: 1>} : vector<8x134xi32>
      %c3_i32 = arith.constant 3 : i32
      %109 = arith.subi %63, %c3_i32 : i32
      %110 = vector.broadcast %109 : i32 to vector<8x134xi32>
      %111 = arith.addi %108, %110 : vector<8x134xi32>
      %c0_68 = arith.constant 0 : index
      %c0_69 = arith.constant 0 : index
      %112 = vector.load %arg6[%c0_68, %c0_69] : memref<8x1xf32, #tpu.memory_space<vmem>>, vector<8x1xf32>
      %c16_i32_70 = arith.constant 16 : i32
      %113 = vector.broadcast %c16_i32_70 : i32 to vector<8x134xi32>
      %114 = arith.cmpi slt, %111, %113 : vector<8x134xi32>
      %c0_71 = arith.constant 0 : index
      %c0_72 = arith.constant 0 : index
      %115 = vector.load %arg9[%c0_71, %c0_72] : memref<8x134xf32, #tpu.memory_space<vmem>>, vector<8x134xf32>
      %116 = vector.shape_cast %112 : vector<8x1xf32> to vector<8x1xf32>
      %117 = vector.broadcast %116 : vector<8x1xf32> to vector<8x134xf32>
      %118 = arith.select %114, %115, %117 : vector<8x134xi1>, vector<8x134xf32>
      %c0_73 = arith.constant 0 : index
      %c0_74 = arith.constant 0 : index
      %119 = vector.load %arg9[%c0_73, %c0_74] : memref<8x134xf32, #tpu.memory_space<vmem>>, vector<8x134xf32>
      tpu.vector_store %arg9[%c0_73, %c0_74], %118 {strides = array<i32>} : memref<8x134xf32, #tpu.memory_space<vmem>>, vector<8x134xf32>,
      %c0_75 = arith.constant 0 : index
      %c0_76 = arith.constant 0 : index
      %120 = vector.load %arg10[%c0_75, %c0_76] : memref<8x134xf32, #tpu.memory_space<vmem>>, vector<8x134xf32>
      %121 = vector.shape_cast %112 : vector<8x1xf32> to vector<8x1xf32>
      %122 = vector.broadcast %121 : vector<8x1xf32> to vector<8x134xf32>
      %123 = arith.select %114, %120, %122 : vector<8x134xi1>, vector<8x134xf32>
      %c0_77 = arith.constant 0 : index
      %c0_78 = arith.constant 0 : index
      %124 = vector.load %arg10[%c0_77, %c0_78] : memref<8x134xf32, #tpu.memory_space<vmem>>, vector<8x134xf32>
      tpu.vector_store %arg10[%c0_77, %c0_78], %123 {strides = array<i32>} : memref<8x134xf32, #tpu.memory_space<vmem>>, vector<8x134xf32>,
    } else {
    }
    %c0_36 = arith.constant 0 : index
    %c0_37 = arith.constant 0 : index
    %72 = vector.load %arg10[%c0_36, %c0_37] : memref<8x134xf32, #tpu.memory_space<vmem>>, vector<8x128xf32>
    %c0_38 = arith.constant 0 : index
    %c6_39 = arith.constant 6 : index
    %73 = vector.load %arg9[%c0_38, %c6_39] : memref<8x134xf32, #tpu.memory_space<vmem>>, vector<8x128xf32>
    %74 = arith.addf %72, %73 : vector<8x128xf32>
    %cst_40 = arith.constant 0.00202896656 : f32
    %75 = vector.broadcast %cst_40 : f32 to vector<8x128xf32>
    %76 = arith.mulf %75, %74 : vector<8x128xf32>
    %c0_41 = arith.constant 0 : index
    %c1_42 = arith.constant 1 : index
    %77 = vector.load %arg10[%c0_41, %c1_42] : memref<8x134xf32, #tpu.memory_space<vmem>>, vector<8x128xf32>
    %c0_43 = arith.constant 0 : index
    %c5_44 = arith.constant 5 : index
    %78 = vector.load %arg9[%c0_43, %c5_44] : memref<8x134xf32, #tpu.memory_space<vmem>>, vector<8x128xf32>
    %79 = arith.addf %77, %78 : vector<8x128xf32>
    %cst_45 = arith.constant -0.0255434643 : f32
    %80 = vector.broadcast %cst_45 : f32 to vector<8x128xf32>
    %81 = arith.mulf %80, %79 : vector<8x128xf32>
    %82 = arith.addf %76, %81 : vector<8x128xf32>
    %c0_46 = arith.constant 0 : index
    %c2_47 = arith.constant 2 : index
    %83 = vector.load %arg10[%c0_46, %c2_47] : memref<8x134xf32, #tpu.memory_space<vmem>>, vector<8x128xf32>
    %c0_48 = arith.constant 0 : index
    %c4_49 = arith.constant 4 : index
    %84 = vector.load %arg9[%c0_48, %c4_49] : memref<8x134xf32, #tpu.memory_space<vmem>>, vector<8x128xf32>
    %85 = arith.addf %83, %84 : vector<8x128xf32>
    %cst_50 = arith.constant 0.128572613 : f32
    %86 = vector.broadcast %cst_50 : f32 to vector<8x128xf32>
    %87 = arith.mulf %86, %85 : vector<8x128xf32>
    %88 = arith.addf %82, %87 : vector<8x128xf32>
    %c0_51 = arith.constant 0 : index
    %c3_52 = arith.constant 3 : index
    %89 = vector.load %arg10[%c0_51, %c3_52] : memref<8x134xf32, #tpu.memory_space<vmem>>, vector<8x128xf32>
    %c0_53 = arith.constant 0 : index
    %c3_54 = arith.constant 3 : index
    %90 = vector.load %arg9[%c0_53, %c3_54] : memref<8x134xf32, #tpu.memory_space<vmem>>, vector<8x128xf32>
    %91 = arith.addf %89, %90 : vector<8x128xf32>
    %cst_55 = arith.constant 0.443209797 : f32
    %92 = vector.broadcast %cst_55 : f32 to vector<8x128xf32>
    %93 = arith.mulf %92, %91 : vector<8x128xf32>
    %94 = arith.addf %88, %93 : vector<8x128xf32>
    %c0_56 = arith.constant 0 : index
    %c4_57 = arith.constant 4 : index
    %95 = vector.load %arg10[%c0_56, %c4_57] : memref<8x134xf32, #tpu.memory_space<vmem>>, vector<8x128xf32>
    %c0_58 = arith.constant 0 : index
    %c2_59 = arith.constant 2 : index
    %96 = vector.load %arg9[%c0_58, %c2_59] : memref<8x134xf32, #tpu.memory_space<vmem>>, vector<8x128xf32>
    %97 = arith.addf %95, %96 : vector<8x128xf32>
    %cst_60 = arith.constant -0.0576573759 : f32
    %98 = vector.broadcast %cst_60 : f32 to vector<8x128xf32>
    %99 = arith.mulf %98, %97 : vector<8x128xf32>
    %100 = arith.addf %94, %99 : vector<8x128xf32>
    %c0_61 = arith.constant 0 : index
    %c5_62 = arith.constant 5 : index
    %101 = vector.load %arg10[%c0_61, %c5_62] : memref<8x134xf32, #tpu.memory_space<vmem>>, vector<8x128xf32>
    %c0_63 = arith.constant 0 : index
    %c1_64 = arith.constant 1 : index
    %102 = vector.load %arg9[%c0_63, %c1_64] : memref<8x134xf32, #tpu.memory_space<vmem>>, vector<8x128xf32>
    %103 = arith.addf %101, %102 : vector<8x128xf32>
    %cst_65 = arith.constant 0.00938946381 : f32
    %104 = vector.broadcast %cst_65 : f32 to vector<8x128xf32>
    %105 = arith.mulf %104, %103 : vector<8x128xf32>
    %106 = arith.addf %100, %105 : vector<8x128xf32>
    %c0_66 = arith.constant 0 : index
    %c0_67 = arith.constant 0 : index
    %107 = vector.load %arg7[%c0_66, %c0_67] : memref<8x128xf32, #tpu.memory_space<vmem>>, vector<8x128xf32>
    tpu.vector_store %arg7[%c0_66, %c0_67], %106 {strides = array<i32>} : memref<8x128xf32, #tpu.memory_space<vmem>>, vector<8x128xf32>,
    return
  }
  func.func @transform_0(%arg0: i32, %arg1: i32) -> (i32, i32) {
    %c0_i32 = arith.constant 0 : i32
    return %arg0, %arg1 : i32, i32
  }
  func.func @transform_1(%arg0: i32, %arg1: i32) -> (i32, i32) {
    %c1_i32 = arith.constant 1 : i32
    %0 = arith.addi %arg1, %c1_i32 : i32
    %c1_i32_0 = arith.constant 1 : i32
    %1 = arith.muli %0, %c1_i32_0 : i32
    %c0_i32 = arith.constant 0 : i32
    return %arg0, %1 : i32, i32
  }
  func.func @transform_2(%arg0: i32, %arg1: i32) -> (i32, i32) {
    %c0_i32 = arith.constant 0 : i32
    %c0_i32_0 = arith.constant 0 : i32
    return %arg0, %c0_i32 : i32, i32
  }
  func.func @transform_3(%arg0: i32, %arg1: i32) -> (i32, i32) {
    %c0_i32 = arith.constant 0 : i32
    %c0_i32_0 = arith.constant 0 : i32
    return %arg0, %c0_i32 : i32, i32
  }
  func.func @transform_4(%arg0: i32, %arg1: i32) -> (i32, i32) {
    %c0_i32 = arith.constant 0 : i32
    %c0_i32_0 = arith.constant 0 : i32
    return %arg0, %c0_i32 : i32, i32
  }
  func.func @transform_5(%arg0: i32, %arg1: i32) -> (i32, i32) {
    %c0_i32 = arith.constant 0 : i32
    return %arg0, %arg1 : i32, i32
  }
}

</mosaic_0001>

<llo_original>
// kernel: tpu_custom_call.1
$region0: #{tpu_custom_call.1}
  #allocation0 [shape = 'u32[]', space=smem, size = 0x4, offset = 0x4, fixed_abs, tag = 'smem constant byte address 0x4 - core index']
  #allocation1 [shape = 'u32[144,128]{1,0:T(1,128)}', space=vmem, size = 0x12000, scoped, tag = 'internal scratch']
  #allocation2 [shape = 'f32[8,144]{1,0:T(8,128)}', space=vmem, size = 0x2000, scoped, tag = 'scratch operand']
  #allocation3 [shape = 'f32[8,134]{1,0:T(8,128)}', space=vmem, size = 0x2000, scoped, tag = 'scratch operand']
  #allocation4 [shape = 'f32[8,134]{1,0:T(8,128)}', space=vmem, size = 0x2000, scoped, tag = 'scratch operand']
  %s0 = inlined_call_operand.vmem [shape: f32[8,256], index: 0, kind: input, shape index: {}]
  %s1 = inlined_call_operand.hbm [shape: f32[8,256], index: 1, kind: input, shape index: {}]
  %s2 = inlined_call_operand.vmem [shape: f32[8,1], index: 2, kind: input, shape index: {}]
  %s3 = inlined_call_operand.vmem [shape: f32[8,1], index: 3, kind: input, shape index: {}]
  %s4 = inlined_call_operand.vmem [shape: f32[8,1], index: 4, kind: input, shape index: {}]
  %s5 = inlined_call_operand.hbm [shape: f32[8,128], index: 5, kind: output, shape index: {}]
  %s6 = sld [smem:[#allocation0]]
  $region42: #{tpu_custom_call.1} parent=0
    _
  %s8 = ssub.s32 1, %s6
  %s9 = scalar_select 0, %s8, %s6
  $region1: #{tpu_custom_call.1} parent=0
    #allocation5 [shape = 'u8[4096]{0}', space=vmem, size = 0x1000, scoped, tag = 'input window, operand 1, single buffered']
    #allocation6 [shape = 's32[1]{0}', space=sflag, size = 0x4, scoped, tag = 'scoped memory for tpu_custom_call.1']
    #allocation7 [shape = 's32[1]{0}', space=sflag, size = 0x4, scoped, tag = 'scoped memory for tpu_custom_call.1']
    #allocation8 [shape = 'u8[4096]{0}', space=vmem, size = 0x1000, scoped, tag = 'output window, operand 0, single buffered']
    %10 = vsyncpa [#allocation6], 0
    %11 = vsyncpa [#allocation7], 0
    // Predicated region
    $region2: #{tpu_custom_call.1} parent=1 // pred_check
      _
    $region3: #{tpu_custom_call.1} parent=1 // pred_check_branch
      %13 = sbr.rel (0) target = $region5
    $region4: #{tpu_custom_call.1} parent=1 // pred_region
      _
    $region5: #{tpu_custom_call.1} parent=1 // pred_fallthru
      _
    // Predicated region
    $region6: #{tpu_custom_call.1} parent=1 // pred_check
      _
    $region7: #{tpu_custom_call.1} parent=1 // pred_check_branch
      %15 = sbr.rel (0) target = $region9
    $region8: #{tpu_custom_call.1} parent=1 // pred_region
      %s16 = sadd.s32 0, 1
      %s18 = ssub.s32 128, 128
      %19 = vsyncadd [#allocation6], %s18
      %s20 = smul.addr %s16, 128
      %s21 = scalar_lea.hbm %s1, %s20
      %s23 = sshll.u32 [#allocation5], 4
      %s24 = int_to_ptr.vmem [resolvable:$true] %s23
      %26 = dma.hbm_to_vmem [thread:$0]  %s21, 128, %s24, [#allocation6]
    $region9: #{tpu_custom_call.1} parent=1 // pred_fallthru
      _
    // Predicated region
    $region10: #{tpu_custom_call.1} parent=1 // pred_check
      _
    $region11: #{tpu_custom_call.1} parent=1 // pred_check_branch
      %28 = sbr.rel (0) target = $region13
    $region12: #{tpu_custom_call.1} parent=1 // pred_region
      _
    $region13: #{tpu_custom_call.1} parent=1 // pred_fallthru
      _
    // Predicated region
    $region14: #{tpu_custom_call.1} parent=1 // pred_check
      _
    $region15: #{tpu_custom_call.1} parent=1 // pred_check_branch
      %30 = sbr.rel (0) target = $region17
    $region16: #{tpu_custom_call.1} parent=1 // pred_region
      _
    $region17: #{tpu_custom_call.1} parent=1 // pred_fallthru
      _
    // Predicated region
    $region18: #{tpu_custom_call.1} parent=1 // pred_check
      _
    $region19: #{tpu_custom_call.1} parent=1 // pred_check_branch
      %32 = sbr.rel (0) target = $region21
    $region20: #{tpu_custom_call.1} parent=1 // pred_region
      _
    $region21: #{tpu_custom_call.1} parent=1 // pred_fallthru
      _
    // Predicated region
    $region22: #{tpu_custom_call.1} parent=1 // pred_check
      _
    $region23: #{tpu_custom_call.1} parent=1 // pred_check_branch
      %34 = sbr.rel (0) target = $region25
    $region24: #{tpu_custom_call.1} parent=1 // pred_region
      %35 = dma.done [#allocation6], 128
    $region25: #{tpu_custom_call.1} parent=1 // pred_fallthru
      _
    %s36 = sadd.s32 0, 1
    %v37 = vld [vmem:[%s0] sm:$0xff]
    %38 = vst [vmem:[#allocation2] sm:$0xff] %v37
    %v39 = vld [vmem:[#allocation5] sm:$0xff]
    %vm40 = vcmask 130048
    %41 = vst.msk [vmem:[#allocation2 + $0x8] sm:$0xff] %vm40, %v39
    %v42 = vld [vmem:[#allocation2] sm:$0xff]
    %v43 = vld [vmem:[#allocation2 + $0x8] sm:$0xff]
    %v44 = vmul.f32 %v42, 0.004057933
    %v45 = vmul.f32 %v43, 0.004057933
    %v46 = vmul.f32 %v42, -0.05108693
    %v47 = vmul.f32 %v43, -0.05108693
    %50 = vrot.lane.b32.xlu0 %v46, 127
    %v51 = vpop.permute.xlu0 %50
    %52 = vrot.lane.b32.xlu0 %v47, 127
    %v53 = vpop.permute.xlu0 %52
    %vm54 = vcmask 1039360
    %v55 = vsel %vm54, %v51, %v53
    %v58 = vadd.f32 %v44, %v55
    %v59 = vadd.f32 %v45, %v53
    %v60 = vmul.f32 %v42, 0.018778928
    %v61 = vmul.f32 %v43, 0.018778928
    %v62 = vmul.f32 %v42, 0.25714523
    %v63 = vmul.f32 %v43, 0.25714523
    %66 = vrot.lane.b32.xlu0 %v62, 126
    %v67 = vpop.permute.xlu0 %66
    %68 = vrot.lane.b32.xlu0 %v63, 126
    %v69 = vpop.permute.xlu0 %68
    %vm70 = vcmask 1031168
    %v71 = vsel %vm70, %v67, %v69
    %v74 = vadd.f32 %v58, %v71
    %v75 = vadd.f32 %v59, %v69
    %v76 = vmul.f32 %v42, -0.11531475
    %v77 = vmul.f32 %v43, -0.11531475
    %80 = vrot.lane.b32.xlu0 %v76, 127
    %v81 = vpop.permute.xlu0 %80
    %82 = vrot.lane.b32.xlu0 %v77, 127
    %v83 = vpop.permute.xlu0 %82
    %v84 = vsel %vm54, %v81, %v83
    %v87 = vadd.f32 %v60, %v84
    %v88 = vadd.f32 %v61, %v83
    %v89 = vmul.f32 %v42, 0.8864196
    %v90 = vmul.f32 %v43, 0.8864196
    %93 = vrot.lane.b32.xlu0 %v89, 125
    %v94 = vpop.permute.xlu0 %93
    %95 = vrot.lane.b32.xlu0 %v90, 125
    %v96 = vpop.permute.xlu0 %95
    %vm97 = vcmask 1022976
    %v98 = vsel %vm97, %v94, %v96
    %v101 = vadd.f32 %v74, %v98
    %v102 = vadd.f32 %v75, %v96
    %103 = vrot.lane.b32.xlu0 %v89, 126
    %v104 = vpop.permute.xlu0 %103
    %105 = vrot.lane.b32.xlu0 %v90, 126
    %v106 = vpop.permute.xlu0 %105
    %v107 = vsel %vm70, %v104, %v106
    %v110 = vadd.f32 %v87, %v107
    %v111 = vadd.f32 %v88, %v106
    %112 = vrot.lane.b32.xlu0 %v76, 124
    %v113 = vpop.permute.xlu0 %112
    %114 = vrot.lane.b32.xlu0 %v77, 124
    %v115 = vpop.permute.xlu0 %114
    %vm116 = vcmask 1014784
    %v117 = vsel %vm116, %v113, %v115
    %v120 = vadd.f32 %v101, %v117
    %v121 = vadd.f32 %v102, %v115
    %122 = vrot.lane.b32.xlu0 %v62, 125
    %v123 = vpop.permute.xlu0 %122
    %124 = vrot.lane.b32.xlu0 %v63, 125
    %v125 = vpop.permute.xlu0 %124
    %v126 = vsel %vm97, %v123, %v125
    %v129 = vadd.f32 %v110, %v126
    %v130 = vadd.f32 %v111, %v125
    %133 = vrot.lane.b32.xlu0 %v60, 123
    %v134 = vpop.permute.xlu0 %133
    %135 = vrot.lane.b32.xlu0 %v61, 123
    %v136 = vpop.permute.xlu0 %135
    %vm137 = vcmask 1006592
    %v138 = vsel %vm137, %v134, %v136
    %v141 = vadd.f32 %v120, %v138
    %v142 = vadd.f32 %v121, %v136
    %143 = vrot.lane.b32.xlu0 %v46, 124
    %v144 = vpop.permute.xlu0 %143
    %145 = vrot.lane.b32.xlu0 %v47, 124
    %v146 = vpop.permute.xlu0 %145
    %v147 = vsel %vm116, %v144, %v146
    %v150 = vadd.f32 %v129, %v147
    %v151 = vadd.f32 %v130, %v146
    %154 = vrot.lane.b32.xlu0 %v44, 123
    %v155 = vpop.permute.xlu0 %154
    %156 = vrot.lane.b32.xlu0 %v45, 123
    %v157 = vpop.permute.xlu0 %156
    %v158 = vsel %vm137, %v155, %v157
    %v161 = vadd.f32 %v150, %v158
    %v162 = vadd.f32 %v151, %v157
    %v163 = vld [vmem:[%s2] sm:$0xff]
    %v164 = vld [vmem:[%s3] sm:$0xff]
    %166 = vset.pattern.permute.xlu0 0
    %167 = vperm.xlu0 %166, %v163
    %v168 = vpop.permute.xlu0 %167
    %v170 = vmul.f32 %v168, %v141
    %v171 = vmul.f32 %v168, %v142
    %v172 = vand.u32 2147483647, %v170
    %vm173 = vcmp.le.f32.partialorder %v172, 0.7853982
    %vm174 = vcmp.lt.s32.totalorder %v170, 0
    %v175 = vand.u32 %v170, 2139095040
    %v176 = vshrl.u32 %v175, 23
    %v177 = vsub.s32 %v176, 127
    %v178 = vand.u32 2147483647, %v170
    %v179 = vand.u32 %v178, 8388607
    %v180 = vor.u32 %v179, 8388608
    %v181 = vsub.s32 0, %v180
    %v182 = vadd.s32 %v177, 1
    %vm183 = vcmp.gt.s32.totalorder %v182, 0
    %v184 = vsel %vm183, %v182, 0
    %v185 = vshrl.u32 %v184, 5
    %v186 = vand.u32 %v184, 31
    %v187 = vsub.s32 32, %v186
    %v188 = vshrl.u32 683565275, %v187
    %v189 = vshll.u32 683565275, %v186
    %v190 = vshrl.u32 2475754826, %v187
    %v191 = vor.u32 %v189, %v190
    %v192 = vshll.u32 2475754826, %v186
    %v193 = vshrl.u32 2131351028, %v187
    %v194 = vor.u32 %v192, %v193
    %v195 = vshll.u32 2131351028, %v186
    %v196 = vshrl.u32 2102212464, %v187
    %v197 = vor.u32 %v195, %v196
    %v198 = vshll.u32 2102212464, %v186
    %v199 = vshrl.u32 920167782, %v187
    %v200 = vor.u32 %v198, %v199
    %v201 = vshll.u32 920167782, %v186
    %v202 = vshrl.u32 1326507024, %v187
    %v203 = vor.u32 %v201, %v202
    %vm204 = vcmp.lt.s32.totalorder %v185, 1
    %vm205 = vcmp.lt.s32.totalorder %v185, 2
    %vm206 = vcmp.lt.s32.totalorder %v185, 3
    %vm207 = vcmp.lt.s32.totalorder %v185, 4
    %v208 = vsel %vm204, %v188, %v191
    %v209 = vsel %vm207, %v197, 2102212464
    %v210 = vsel %vm206, %v194, %v209
    %v211 = vsel %vm205, %v208, %v210
    %v212 = vsel %vm204, %v191, %v194
    %v213 = vsel %vm207, %v200, 920167782
    %v214 = vsel %vm206, %v197, %v213
    %v215 = vsel %vm205, %v212, %v214
    %v216 = vsel %vm204, %v194, %v197
    %v217 = vsel %vm207, %v203, 1326507024
    %v218 = vsel %vm206, %v200, %v217
    %v219 = vsel %vm205, %v216, %v218
    %v220 = vshll.u32 %v180, 8
    %v221 = vmul.u32.u64.compose %v220, %v219
    %v222 = vextract.low.u32 %v221
    %v223 = vextract.high.u32 %v221
    %v224 = vmul.u32.u64.compose %v220, %v215
    %v225 = vextract.low.u32 %v224
    %v226 = vextract.high.u32 %v224
    %v227 = vmul.u32 %v220, %v211
    %v228 = vadd.s32 %v223, %v225
    %vm229 = vc.u32 %v223, %v225
    %v230 = vadd.s32 %v226, 1
    %v231 = vsel %vm229, %v230, %v226
    %v232 = vadd.s32 %v227, %v231
    %v233 = vadd.s32 %v232, 536870912
    %v234 = vshrl.u32 %v233, 30
    %v235 = vshll.u32 %v234, 30
    %v236 = vsub.s32 %v232, %v235
    %vm237 = vcmp.lt.s32.totalorder %v236, 0
    %v238 = vsub.s32 0, %v236
    %v239 = vsel %vm237, %v238, %v236
    %v240 = vclz %v239
    %v241 = vsub.s32 %v240, 2
    %vm242 = vcmp.gt.s32.totalorder 0, %v241
    %v243 = vsel %vm242, 0, %v241
    %v244 = vsub.s32 32, %v243
    %v245 = vshll.u32 %v236, %v243
    %v246 = vshrl.u32 %v228, %v244
    %v247 = vor.u32 %v245, %v246
    %v248 = vsub.s32 4294967266, %v243
    %v249 = vadd.s32 %v248, 127
    %v250 = vshll.u32 %v249, 23
    %v251 = vor.u32 4788187, %v250
    %v252 = vand.u32 2147483647, %v251
    %v254 = vcvt.s32.f32 %v247
    %v255 = vmul.f32 %v254, %v252
    %v256 = vxor.u32 %v255, 2147483648
    %v257 = vsel %vm174, %v256, %v255
    %v258 = vsub.s32 4, %v234
    %v259 = vsel %vm174, %v258, %v234
    %v260 = vsel %vm173, %v170, %v257
    %v261 = vsel %vm173, 0, %v259
    %v262 = vcosq.f32.pop %v260
    %v263 = vsinq.f32.pop %v260
    %vm264 = vweird.f32 %v170
    %v265 = vadd.s32 %v261, 3
    %v266 = vand.u32 %v265, 3
    %vm267 = vcmp.lt.s32.totalorder %v266, 2
    %vm268 = vcmp.eq.s32.totalorder %v266, 0
    %v269 = vxor.u32 %v263, 2147483648
    %v270 = vsel %vm268, %v262, %v269
    %vm271 = vcmp.eq.s32.totalorder %v266, 2
    %v272 = vxor.u32 %v262, 2147483648
    %v273 = vsel %vm271, %v272, %v263
    %v274 = vsel %vm267, %v270, %v273
    %v275 = vsel %vm264, nan, %v274
    %v276 = vand.u32 2147483647, %v171
    %vm277 = vcmp.le.f32.partialorder %v276, 0.7853982
    %vm278 = vcmp.lt.s32.totalorder %v171, 0
    %v279 = vand.u32 %v171, 2139095040
    %v280 = vshrl.u32 %v279, 23
    %v281 = vsub.s32 %v280, 127
    %v282 = vand.u32 2147483647, %v171
    %v283 = vand.u32 %v282, 8388607
    %v284 = vor.u32 %v283, 8388608
    %v285 = vsub.s32 0, %v284
    %v286 = vadd.s32 %v281, 1
    %vm287 = vcmp.gt.s32.totalorder %v286, 0
    %v288 = vsel %vm287, %v286, 0
    %v289 = vshrl.u32 %v288, 5
    %v290 = vand.u32 %v288, 31
    %v291 = vsub.s32 32, %v290
    %v292 = vshrl.u32 683565275, %v291
    %v293 = vshll.u32 683565275, %v290
    %v294 = vshrl.u32 2475754826, %v291
    %v295 = vor.u32 %v293, %v294
    %v296 = vshll.u32 2475754826, %v290
    %v297 = vshrl.u32 2131351028, %v291
    %v298 = vor.u32 %v296, %v297
    %v299 = vshll.u32 2131351028, %v290
    %v300 = vshrl.u32 2102212464, %v291
    %v301 = vor.u32 %v299, %v300
    %v302 = vshll.u32 2102212464, %v290
    %v303 = vshrl.u32 920167782, %v291
    %v304 = vor.u32 %v302, %v303
    %v305 = vshll.u32 920167782, %v290
    %v306 = vshrl.u32 1326507024, %v291
    %v307 = vor.u32 %v305, %v306
    %vm308 = vcmp.lt.s32.totalorder %v289, 1
    %vm309 = vcmp.lt.s32.totalorder %v289, 2
    %vm310 = vcmp.lt.s32.totalorder %v289, 3
    %vm311 = vcmp.lt.s32.totalorder %v289, 4
    %v312 = vsel %vm308, %v292, %v295
    %v313 = vsel %vm311, %v301, 2102212464
    %v314 = vsel %vm310, %v298, %v313
    %v315 = vsel %vm309, %v312, %v314
    %v316 = vsel %vm308, %v295, %v298
    %v317 = vsel %vm311, %v304, 920167782
    %v318 = vsel %vm310, %v301, %v317
    %v319 = vsel %vm309, %v316, %v318
    %v320 = vsel %vm308, %v298, %v301
    %v321 = vsel %vm311, %v307, 1326507024
    %v322 = vsel %vm310, %v304, %v321
    %v323 = vsel %vm309, %v320, %v322
    %v324 = vshll.u32 %v284, 8
    %v325 = vmul.u32.u64.compose %v324, %v323
    %v326 = vextract.low.u32 %v325
    %v327 = vextract.high.u32 %v325
    %v328 = vmul.u32.u64.compose %v324, %v319
    %v329 = vextract.low.u32 %v328
    %v330 = vextract.high.u32 %v328
    %v331 = vmul.u32 %v324, %v315
    %v332 = vadd.s32 %v327, %v329
    %vm333 = vc.u32 %v327, %v329
    %v334 = vadd.s32 %v330, 1
    %v335 = vsel %vm333, %v334, %v330
    %v336 = vadd.s32 %v331, %v335
    %v337 = vadd.s32 %v336, 536870912
    %v338 = vshrl.u32 %v337, 30
    %v339 = vshll.u32 %v338, 30
    %v340 = vsub.s32 %v336, %v339
    %vm341 = vcmp.lt.s32.totalorder %v340, 0
    %v342 = vsub.s32 0, %v340
    %v343 = vsel %vm341, %v342, %v340
    %v344 = vclz %v343
    %v345 = vsub.s32 %v344, 2
    %vm346 = vcmp.gt.s32.totalorder 0, %v345
    %v347 = vsel %vm346, 0, %v345
    %v348 = vsub.s32 32, %v347
    %v349 = vshll.u32 %v340, %v347
    %v350 = vshrl.u32 %v332, %v348
    %v351 = vor.u32 %v349, %v350
    %v352 = vsub.s32 4294967266, %v347
    %v353 = vadd.s32 %v352, 127
    %v354 = vshll.u32 %v353, 23
    %v355 = vor.u32 4788187, %v354
    %v356 = vand.u32 2147483647, %v355
    %v358 = vcvt.s32.f32 %v351
    %v359 = vmul.f32 %v358, %v356
    %v360 = vxor.u32 %v359, 2147483648
    %v361 = vsel %vm278, %v360, %v359
    %v362 = vsub.s32 4, %v338
    %v363 = vsel %vm278, %v362, %v338
    %v364 = vsel %vm277, %v171, %v361
    %v365 = vsel %vm277, 0, %v363
    %v366 = vcosq.f32.pop %v364
    %v367 = vsinq.f32.pop %v364
    %vm368 = vweird.f32 %v171
    %v369 = vadd.s32 %v365, 3
    %v370 = vand.u32 %v369, 3
    %vm371 = vcmp.lt.s32.totalorder %v370, 2
    %vm372 = vcmp.eq.s32.totalorder %v370, 0
    %v373 = vxor.u32 %v367, 2147483648
    %v374 = vsel %vm372, %v366, %v373
    %vm375 = vcmp.eq.s32.totalorder %v370, 2
    %v376 = vxor.u32 %v366, 2147483648
    %v377 = vsel %vm375, %v376, %v367
    %v378 = vsel %vm371, %v374, %v377
    %v379 = vsel %vm368, nan, %v378
    %v380 = vmul.f32 %v168, %v161
    %v381 = vmul.f32 %v168, %v162
    %v382 = vand.u32 2147483647, %v380
    %vm383 = vcmp.le.f32.partialorder %v382, 0.7853982
    %vm384 = vcmp.lt.s32.totalorder %v380, 0
    %v385 = vand.u32 %v380, 2139095040
    %v386 = vshrl.u32 %v385, 23
    %v387 = vsub.s32 %v386, 127
    %v388 = vand.u32 2147483647, %v380
    %v389 = vand.u32 %v388, 8388607
    %v390 = vor.u32 %v389, 8388608
    %v391 = vsub.s32 0, %v390
    %v392 = vadd.s32 %v387, 1
    %vm393 = vcmp.gt.s32.totalorder %v392, 0
    %v394 = vsel %vm393, %v392, 0
    %v395 = vshrl.u32 %v394, 5
    %v396 = vand.u32 %v394, 31
    %v397 = vsub.s32 32, %v396
    %v398 = vshrl.u32 683565275, %v397
    %v399 = vshll.u32 683565275, %v396
    %v400 = vshrl.u32 2475754826, %v397
    %v401 = vor.u32 %v399, %v400
    %v402 = vshll.u32 2475754826, %v396
    %v403 = vshrl.u32 2131351028, %v397
    %v404 = vor.u32 %v402, %v403
    %v405 = vshll.u32 2131351028, %v396
    %v406 = vshrl.u32 2102212464, %v397
    %v407 = vor.u32 %v405, %v406
    %v408 = vshll.u32 2102212464, %v396
    %v409 = vshrl.u32 920167782, %v397
    %v410 = vor.u32 %v408, %v409
    %v411 = vshll.u32 920167782, %v396
    %v412 = vshrl.u32 1326507024, %v397
    %v413 = vor.u32 %v411, %v412
    %vm414 = vcmp.lt.s32.totalorder %v395, 1
    %vm415 = vcmp.lt.s32.totalorder %v395, 2
    %vm416 = vcmp.lt.s32.totalorder %v395, 3
    %vm417 = vcmp.lt.s32.totalorder %v395, 4
    %v418 = vsel %vm414, %v398, %v401
    %v419 = vsel %vm417, %v407, 2102212464
    %v420 = vsel %vm416, %v404, %v419
    %v421 = vsel %vm415, %v418, %v420
    %v422 = vsel %vm414, %v401, %v404
    %v423 = vsel %vm417, %v410, 920167782
    %v424 = vsel %vm416, %v407, %v423
    %v425 = vsel %vm415, %v422, %v424
    %v426 = vsel %vm414, %v404, %v407
    %v427 = vsel %vm417, %v413, 1326507024
    %v428 = vsel %vm416, %v410, %v427
    %v429 = vsel %vm415, %v426, %v428
    %v430 = vshll.u32 %v390, 8
    %v431 = vmul.u32.u64.compose %v430, %v429
    %v432 = vextract.low.u32 %v431
    %v433 = vextract.high.u32 %v431
    %v434 = vmul.u32.u64.compose %v430, %v425
    %v435 = vextract.low.u32 %v434
    %v436 = vextract.high.u32 %v434
    %v437 = vmul.u32 %v430, %v421
    %v438 = vadd.s32 %v433, %v435
    %vm439 = vc.u32 %v433, %v435
    %v440 = vadd.s32 %v436, 1
    %v441 = vsel %vm439, %v440, %v436
    %v442 = vadd.s32 %v437, %v441
    %v443 = vadd.s32 %v442, 536870912
    %v444 = vshrl.u32 %v443, 30
    %v445 = vshll.u32 %v444, 30
    %v446 = vsub.s32 %v442, %v445
    %vm447 = vcmp.lt.s32.totalorder %v446, 0
    %v448 = vsub.s32 0, %v446
    %v449 = vsel %vm447, %v448, %v446
    %v450 = vclz %v449
    %v451 = vsub.s32 %v450, 2
    %vm452 = vcmp.gt.s32.totalorder 0, %v451
    %v453 = vsel %vm452, 0, %v451
    %v454 = vsub.s32 32, %v453
    %v455 = vshll.u32 %v446, %v453
    %v456 = vshrl.u32 %v438, %v454
    %v457 = vor.u32 %v455, %v456
    %v458 = vsub.s32 4294967266, %v453
    %v459 = vadd.s32 %v458, 127
    %v460 = vshll.u32 %v459, 23
    %v461 = vor.u32 4788187, %v460
    %v462 = vand.u32 2147483647, %v461
    %v464 = vcvt.s32.f32 %v457
    %v465 = vmul.f32 %v464, %v462
    %v466 = vxor.u32 %v465, 2147483648
    %v467 = vsel %vm384, %v466, %v465
    %v468 = vsub.s32 4, %v444
    %v469 = vsel %vm384, %v468, %v444
    %v470 = vsel %vm383, %v380, %v467
    %v471 = vsel %vm383, 0, %v469
    %v472 = vcosq.f32.pop %v470
    %v473 = vsinq.f32.pop %v470
    %vm474 = vweird.f32 %v380
    %v475 = vadd.s32 %v471, 3
    %v476 = vand.u32 %v475, 3
    %vm477 = vcmp.lt.s32.totalorder %v476, 2
    %vm478 = vcmp.eq.s32.totalorder %v476, 0
    %v479 = vxor.u32 %v473, 2147483648
    %v480 = vsel %vm478, %v472, %v479
    %vm481 = vcmp.eq.s32.totalorder %v476, 2
    %v482 = vxor.u32 %v472, 2147483648
    %v483 = vsel %vm481, %v482, %v473
    %v484 = vsel %vm477, %v480, %v483
    %v485 = vsel %vm474, nan, %v484
    %v486 = vand.u32 2147483647, %v381
    %vm487 = vcmp.le.f32.partialorder %v486, 0.7853982
    %vm488 = vcmp.lt.s32.totalorder %v381, 0
    %v489 = vand.u32 %v381, 2139095040
    %v490 = vshrl.u32 %v489, 23
    %v491 = vsub.s32 %v490, 127
    %v492 = vand.u32 2147483647, %v381
    %v493 = vand.u32 %v492, 8388607
    %v494 = vor.u32 %v493, 8388608
    %v495 = vsub.s32 0, %v494
    %v496 = vadd.s32 %v491, 1
    %vm497 = vcmp.gt.s32.totalorder %v496, 0
    %v498 = vsel %vm497, %v496, 0
    %v499 = vshrl.u32 %v498, 5
    %v500 = vand.u32 %v498, 31
    %v501 = vsub.s32 32, %v500
    %v502 = vshrl.u32 683565275, %v501
    %v503 = vshll.u32 683565275, %v500
    %v504 = vshrl.u32 2475754826, %v501
    %v505 = vor.u32 %v503, %v504
    %v506 = vshll.u32 2475754826, %v500
    %v507 = vshrl.u32 2131351028, %v501
    %v508 = vor.u32 %v506, %v507
    %v509 = vshll.u32 2131351028, %v500
    %v510 = vshrl.u32 2102212464, %v501
    %v511 = vor.u32 %v509, %v510
    %v512 = vshll.u32 2102212464, %v500
    %v513 = vshrl.u32 920167782, %v501
    %v514 = vor.u32 %v512, %v513
    %v515 = vshll.u32 920167782, %v500
    %v516 = vshrl.u32 1326507024, %v501
    %v517 = vor.u32 %v515, %v516
    %vm518 = vcmp.lt.s32.totalorder %v499, 1
    %vm519 = vcmp.lt.s32.totalorder %v499, 2
    %vm520 = vcmp.lt.s32.totalorder %v499, 3
    %vm521 = vcmp.lt.s32.totalorder %v499, 4
    %v522 = vsel %vm518, %v502, %v505
    %v523 = vsel %vm521, %v511, 2102212464
    %v524 = vsel %vm520, %v508, %v523
    %v525 = vsel %vm519, %v522, %v524
    %v526 = vsel %vm518, %v505, %v508
    %v527 = vsel %vm521, %v514, 920167782
    %v528 = vsel %vm520, %v511, %v527
    %v529 = vsel %vm519, %v526, %v528
    %v530 = vsel %vm518, %v508, %v511
    %v531 = vsel %vm521, %v517, 1326507024
    %v532 = vsel %vm520, %v514, %v531
    %v533 = vsel %vm519, %v530, %v532
    %v534 = vshll.u32 %v494, 8
    %v535 = vmul.u32.u64.compose %v534, %v533
    %v536 = vextract.low.u32 %v535
    %v537 = vextract.high.u32 %v535
    %v538 = vmul.u32.u64.compose %v534, %v529
    %v539 = vextract.low.u32 %v538
    %v540 = vextract.high.u32 %v538
    %v541 = vmul.u32 %v534, %v525
    %v542 = vadd.s32 %v537, %v539
    %vm543 = vc.u32 %v537, %v539
    %v544 = vadd.s32 %v540, 1
    %v545 = vsel %vm543, %v544, %v540
    %v546 = vadd.s32 %v541, %v545
    %v547 = vadd.s32 %v546, 536870912
    %v548 = vshrl.u32 %v547, 30
    %v549 = vshll.u32 %v548, 30
    %v550 = vsub.s32 %v546, %v549
    %vm551 = vcmp.lt.s32.totalorder %v550, 0
    %v552 = vsub.s32 0, %v550
    %v553 = vsel %vm551, %v552, %v550
    %v554 = vclz %v553
    %v555 = vsub.s32 %v554, 2
    %vm556 = vcmp.gt.s32.totalorder 0, %v555
    %v557 = vsel %vm556, 0, %v555
    %v558 = vsub.s32 32, %v557
    %v559 = vshll.u32 %v550, %v557
    %v560 = vshrl.u32 %v542, %v558
    %v561 = vor.u32 %v559, %v560
    %v562 = vsub.s32 4294967266, %v557
    %v563 = vadd.s32 %v562, 127
    %v564 = vshll.u32 %v563, 23
    %v565 = vor.u32 4788187, %v564
    %v566 = vand.u32 2147483647, %v565
    %v568 = vcvt.s32.f32 %v561
    %v569 = vmul.f32 %v568, %v566
    %v570 = vxor.u32 %v569, 2147483648
    %v571 = vsel %vm488, %v570, %v569
    %v572 = vsub.s32 4, %v548
    %v573 = vsel %vm488, %v572, %v548
    %v574 = vsel %vm487, %v381, %v571
    %v575 = vsel %vm487, 0, %v573
    %v576 = vcosq.f32.pop %v574
    %v577 = vsinq.f32.pop %v574
    %vm578 = vweird.f32 %v381
    %v579 = vadd.s32 %v575, 3
    %v580 = vand.u32 %v579, 3
    %vm581 = vcmp.lt.s32.totalorder %v580, 2
    %vm582 = vcmp.eq.s32.totalorder %v580, 0
    %v583 = vxor.u32 %v577, 2147483648
    %v584 = vsel %vm582, %v576, %v583
    %vm585 = vcmp.eq.s32.totalorder %v580, 2
    %v586 = vxor.u32 %v576, 2147483648
    %v587 = vsel %vm585, %v586, %v577
    %v588 = vsel %vm581, %v584, %v587
    %v589 = vsel %vm578, nan, %v588
    %v590 = vmul.f32 %v275, %v275
    %v591 = vmul.f32 %v379, %v379
    %593 = vset.pattern.permute.xlu0 0
    %594 = vperm.xlu0 %593, %v164
    %v595 = vpop.permute.xlu0 %594
    %v597 = vmul.f32 %v595, %v590
    %v598 = vmul.f32 %v595, %v591
    %v599 = vadd.f32 %v141, %v597
    %v600 = vadd.f32 %v142, %v598
    %601 = vst [vmem:[#allocation3] sm:$0xff] %v599
    %vm602 = vcmask 48128
    %603 = vst.msk [vmem:[#allocation3 + $0x8] sm:$0xff] %vm602, %v600
    %v604 = vmul.f32 %v485, %v485
    %v605 = vmul.f32 %v589, %v589
    %v606 = vmul.f32 %v595, %v604
    %v607 = vmul.f32 %v595, %v605
    %v608 = vadd.f32 %v161, %v606
    %v609 = vadd.f32 %v162, %v607
    %612 = vrot.lane.b32.xlu0 %v608, 127
    %v613 = vpop.permute.xlu0 %612
    %614 = vrot.lane.b32.xlu0 %v609, 127
    %v615 = vpop.permute.xlu0 %614
    %v616 = vsel %vm54, %v613, %v615
    %619 = vst [vmem:[#allocation4] sm:$0xff] %v616
    %620 = vst.msk [vmem:[#allocation4 + $0x8] sm:$0xff] %vm602, %v615
    %s621 = smul.u32 0, 128
    %p622 = scmp.eq.s32.totalorder 0, 0
    // Predicated region
    $region26: #{tpu_custom_call.1} parent=1 // pred_check
      %p623 = pneg %p622
    $region27: #{tpu_custom_call.1} parent=1 // pred_check_branch
      %625 = sbr.rel (%p623) target = $region29
    $region28: #{tpu_custom_call.1} parent=1 // pred_region
      %v626 = vlaneseq
      %v627 = vand.u32 %v626, 127
      %v628 = vld [vmem:[#allocation3] sm:$0xff]
      %vm629 = vcmp.lt.s32.totalorder %v627, 3
      %631 = vset.pattern.permute.xlu0 3
      %632 = vperm.xlu0 %631, %v628
      %v633 = vpop.permute.xlu0 %632
      %v635 = vsel %vm629, %v633, %v628
      %636 = vst [vmem:[#allocation3] sm:$0xff] %v635
      %v637 = vld [vmem:[#allocation4] sm:$0xff]
      %v638 = vsel %vm629, %v633, %v637
      %639 = vst [vmem:[#allocation4] sm:$0xff] %v638
    $region29: #{tpu_custom_call.1} parent=1 // pred_fallthru
      _
    %s640 = sadd.s32 %s621, 130
    %p641 = scmp.ge.s32.totalorder %s640, 16
    // Predicated region
    $region30: #{tpu_custom_call.1} parent=1 // pred_check
      %p642 = pneg %p641
    $region31: #{tpu_custom_call.1} parent=1 // pred_check_branch
      %644 = sbr.rel (%p642) target = $region33
    $region32: #{tpu_custom_call.1} parent=1 // pred_region
      %v645 = vlaneseq
      %v646 = vand.u32 %v645, 127
      %v647 = vadd.s32 %v646, 128
      %s648 = ssub.s32 %s621, 3
      %v649 = vstv %s648
      %v650 = vadd.s32 %v646, %v649
      %v651 = vadd.s32 %v647, %v649
      %v652 = vld [vmem:[%s4] sm:$0xff]
      %vm653 = vcmp.lt.s32.totalorder %v650, 16
      %vm654 = vcmp.lt.s32.totalorder %v651, 16
      %v655 = vld [vmem:[#allocation3] sm:$0xff]
      %v656 = vld [vmem:[#allocation3 + $0x8] sm:$0xff]
      %658 = vset.pattern.permute.xlu0 0
      %659 = vperm.xlu0 %658, %v652
      %v660 = vpop.permute.xlu0 %659
      %v662 = vsel %vm653, %v655, %v660
      %v663 = vsel %vm654, %v656, %v660
      %664 = vst [vmem:[#allocation3] sm:$0xff] %v662
      %665 = vst.msk [vmem:[#allocation3 + $0x8] sm:$0xff] %vm602, %v663
      %v666 = vld [vmem:[#allocation4] sm:$0xff]
      %v667 = vld [vmem:[#allocation4 + $0x8] sm:$0xff]
      %v668 = vsel %vm653, %v666, %v660
      %v669 = vsel %vm654, %v667, %v660
      %670 = vst [vmem:[#allocation4] sm:$0xff] %v668
      %671 = vst.msk [vmem:[#allocation4 + $0x8] sm:$0xff] %vm602, %v669
    $region33: #{tpu_custom_call.1} parent=1 // pred_fallthru
      _
    %v672 = vld [vmem:[#allocation4] sm:$0xff]
    %v673 = vld [vmem:[#allocation3] sm:$0xff]
    %v674 = vld [vmem:[#allocation3 + $0x8] sm:$0xff]
    %677 = vrot.lane.b32.xlu0 %v673, 122
    %v678 = vpop.permute.xlu0 %677
    %679 = vrot.lane.b32.xlu0 %v674, 122
    %v680 = vpop.permute.xlu0 %679
    %vm681 = vcmask 998400
    %v682 = vsel %vm681, %v678, %v680
    %v684 = vadd.f32 %v672, %v682
    %v685 = vmul.f32 %v684, 0.0020289666
    %v686 = vld [vmem:[#allocation4 + $0x8] sm:$0xff]
    %687 = vrot.lane.b32.xlu0 %v673, 124
    %v688 = vpop.permute.xlu0 %687
    %689 = vrot.lane.b32.xlu0 %v674, 124
    %v690 = vpop.permute.xlu0 %689
    %v691 = vsel %vm116, %v688, %v690
    %v694 = vadd.f32 %v672, %v691
    %v695 = vadd.f32 %v686, %v690
    %v696 = vmul.f32 %v694, -0.025543464
    %v697 = vmul.f32 %v695, -0.025543464
    %700 = vrot.lane.b32.xlu0 %v696, 127
    %v701 = vpop.permute.xlu0 %700
    %702 = vrot.lane.b32.xlu0 %v697, 127
    %v703 = vpop.permute.xlu0 %702
    %v704 = vsel %vm54, %v701, %v703
    %v706 = vadd.f32 %v685, %v704
    %707 = vrot.lane.b32.xlu0 %v673, 126
    %v708 = vpop.permute.xlu0 %707
    %709 = vrot.lane.b32.xlu0 %v674, 126
    %v710 = vpop.permute.xlu0 %709
    %v711 = vsel %vm70, %v708, %v710
    %v714 = vadd.f32 %v672, %v711
    %v715 = vadd.f32 %v686, %v710
    %v716 = vmul.f32 %v714, 0.12857261
    %v717 = vmul.f32 %v715, 0.12857261
    %720 = vrot.lane.b32.xlu0 %v716, 126
    %v721 = vpop.permute.xlu0 %720
    %722 = vrot.lane.b32.xlu0 %v717, 126
    %v723 = vpop.permute.xlu0 %722
    %v724 = vsel %vm70, %v721, %v723
    %v726 = vadd.f32 %v706, %v724
    %v727 = vadd.f32 %v672, %v673
    %v728 = vadd.f32 %v686, %v674
    %v729 = vmul.f32 %v727, 0.4432098
    %v730 = vmul.f32 %v728, 0.4432098
    %733 = vrot.lane.b32.xlu0 %v729, 125
    %v734 = vpop.permute.xlu0 %733
    %735 = vrot.lane.b32.xlu0 %v730, 125
    %v736 = vpop.permute.xlu0 %735
    %v737 = vsel %vm97, %v734, %v736
    %v739 = vadd.f32 %v726, %v737
    %740 = vrot.lane.b32.xlu0 %v673, 2
    %v741 = vpop.permute.xlu0 %740
    %742 = vrot.lane.b32.xlu0 %v674, 2
    %v743 = vpop.permute.xlu0 %742
    %vm744 = vcmask 15360
    %v745 = vsel %vm744, %v741, %v743
    %v748 = vadd.f32 %v672, %v741
    %v749 = vadd.f32 %v686, %v745
    %v750 = vmul.f32 %v748, -0.057657376
    %v751 = vmul.f32 %v749, -0.057657376
    %754 = vrot.lane.b32.xlu0 %v750, 124
    %v755 = vpop.permute.xlu0 %754
    %756 = vrot.lane.b32.xlu0 %v751, 124
    %v757 = vpop.permute.xlu0 %756
    %v758 = vsel %vm116, %v755, %v757
    %v760 = vadd.f32 %v739, %v758
    %761 = vrot.lane.b32.xlu0 %v673, 4
    %v762 = vpop.permute.xlu0 %761
    %763 = vrot.lane.b32.xlu0 %v674, 4
    %v764 = vpop.permute.xlu0 %763
    %vm765 = vcmask 31744
    %v766 = vsel %vm765, %v762, %v764
    %v769 = vadd.f32 %v672, %v762
    %v770 = vadd.f32 %v686, %v766
    %v771 = vmul.f32 %v769, 0.009389464
    %v772 = vmul.f32 %v770, 0.009389464
    %775 = vrot.lane.b32.xlu0 %v771, 123
    %v776 = vpop.permute.xlu0 %775
    %777 = vrot.lane.b32.xlu0 %v772, 123
    %v778 = vpop.permute.xlu0 %777
    %v779 = vsel %vm137, %v776, %v778
    %v781 = vadd.f32 %v760, %v779
    %782 = vst [vmem:[#allocation8] sm:$0xff] %v781
    // Predicated region
    $region34: #{tpu_custom_call.1} parent=1 // pred_check
      _
    $region35: #{tpu_custom_call.1} parent=1 // pred_check_branch
      %784 = sbr.rel (0) target = $region37
    $region36: #{tpu_custom_call.1} parent=1 // pred_region
      %s786 = ssub.s32 128, 128
      %787 = vsyncadd [#allocation7], %s786
      %s789 = sshll.u32 [#allocation8], 4
      %s790 = int_to_ptr.vmem [resolvable:$true] %s789
      %792 = dma.vmem_to_hbm [thread:$0]  %s790, 128, %s5, [#allocation7]
    $region37: #{tpu_custom_call.1} parent=1 // pred_fallthru
      _
    // Predicated region
    $region38: #{tpu_custom_call.1} parent=1 // pred_check
      _
    $region39: #{tpu_custom_call.1} parent=1 // pred_check_branch
      %794 = sbr.rel (0) target = $region41
    $region40: #{tpu_custom_call.1} parent=1 // pred_region
      %795 = dma.done [#allocation7], 128
    $region41: #{tpu_custom_call.1} parent=1 // pred_fallthru
      _
    %796 = vsyncpa [#allocation6], 1
    %797 = vsyncpa [#allocation7], 1

</llo_original>
